<compile_context>
chip_gen: v7x
topology: tpu7x:2x2x1
jax: 0.10.0
libtpu: 0.0.40
codegen_flags: <defaults>
</compile_context>

<pallas_src>
import functools

import jax
import jax.numpy as jnp
from jax.experimental import pallas as pl
from jax.experimental.pallas import tpu as pltpu


def _rmsnorm_kernel(x_ref, w_ref, o_ref, *, eps: float):
    # x_ref: (block_rows, dim); w_ref: (1, dim) in the weight's native dtype.
    x = x_ref[...].astype(jnp.float32)                    # x.float()
    ms = jnp.mean(x * x, axis=-1, keepdims=True)          # mean over last dim
    normed = x * jax.lax.rsqrt(ms + eps)                  # x * rsqrt(mean + eps)
    normed = normed.astype(x_ref.dtype)                   # .type_as(x)
    # * weight (jnp promotion reproduces torch's type promotion).
    o_ref[...] = (normed * w_ref[...]).astype(o_ref.dtype)


def _tpu_info():
    try:
        fn = getattr(pltpu, "get_tpu_info", None)
        return fn() if fn is not None else None
    except Exception:
        return None


def _device_kind() -> str:
    try:
        return jax.devices()[0].device_kind.lower()
    except Exception:
        return ""


def _num_tensorcores(info) -> int:
    """TensorCores per device (1 on v5e/v6e, 2 on v7x). Conservative default 1."""
    if info is not None:
        for attr in ("num_tensorcores", "tensorcore_count", "num_cores", "core_count"):
            v = getattr(info, attr, None)
            if isinstance(v, int) and v > 0:
                return int(v)
    if "v7" in _device_kind():
        return 2
    return 1


def _vmem_capacity_bytes(info, num_cores: int) -> int:
    """Per-TensorCore VMEM capacity."""
    cap = None
    if info is not None:
        c = getattr(info, "vmem_capacity_bytes", None)
        if c:
            cap = int(c)
    if cap is None:
        kind = _device_kind()
        cap = 64 * 1024 * 1024 if "v7" in kind else 128 * 1024 * 1024
    if num_cores > 1:
        # v7x is 64 MiB *per TC*; guard against a per-chip report.
        cap = min(cap, 64 * 1024 * 1024)
    return cap


def _pick_block_rows(rows: int, dim: int, x_itemsize: int, out_itemsize: int,
                     vmem_cap: int, num_cores: int) -> int:
    """Row tile size: biggest of (a) ~4 MiB input tile target, (b) VMEM budget
    with double-buffering + f32 temps, rounded to sublane packing; only forces
    multiple grid steps when there are multiple TensorCores to feed."""
    packing = max(8, 32 // x_itemsize)      # 8 for f32, 16 for bf16, 32 for int8
    if rows <= packing:
        return rows                          # single full-extent tile

    # Per-row VMEM footprint: 2x input buf + 2x output buf (own dtypes) plus
    # ~3 f32 temporaries (x_f32, x*x / normed_f32, downcast staging).
    bytes_per_row = dim * (2 * x_itemsize + 2 * out_itemsize + 3 * 4)
    budget = vmem_cap // 4                   # headroom (v7x: 16 MiB of 64)
    budget_rows = max(packing, budget // max(bytes_per_row, 1))

    # Bytes-based target: ~4 MiB per input tile (measured ~85% of HBM roofline
    # needs multi-MiB tiles; 0.5 MiB tiles sit near ~63%).
    target_rows = max(packing, (4 * 1024 * 1024) // max(dim * x_itemsize, 1))

    br = min(budget_rows, target_rows)

    if num_cores > 1:
        # Give every TensorCore at least one block (balanced split).
        br = min(br, pl.cdiv(rows, num_cores))

    br = max(packing, (br // packing) * packing)
    return min(br, rows)


def rmsnorm(x: jax.Array, weight: jax.Array, eps: float = 1e-5,
            block_rows: int | None = None) -> jax.Array:
    """RMSNorm over the last axis of x. weight has shape (dim,)."""
    orig_shape = x.shape
    dim = orig_shape[-1]
    assert weight.shape == (dim,)

    x2d = x.reshape(-1, dim)
    rows = x2d.shape[0]

    # Output dtype follows torch: `normed.type_as(x) * weight` promotes.
    out_dtype = jnp.result_type(x.dtype, weight.dtype)
    x_itemsize = jnp.dtype(x.dtype).itemsize
    out_itemsize = jnp.dtype(out_dtype).itemsize

    info = _tpu_info()
    num_cores = _num_tensorcores(info)
    vmem_cap = _vmem_capacity_bytes(info, num_cores)

    if block_rows is None:
        block_rows = _pick_block_rows(rows, dim, x_itemsize, out_itemsize,
                                      vmem_cap, num_cores)

    w2d = weight.reshape(1, dim)             # native dtype; resident VMEM block
    grid = (pl.cdiv(rows, block_rows),)
    vmem_limit = min((vmem_cap * 3) // 4, 100 * 1024 * 1024)  # 48 MiB on v7x

    kernel = functools.partial(_rmsnorm_kernel, eps=eps)

    def _call(dim_semantics):
        return pl.pallas_call(
            kernel,
            out_shape=jax.ShapeDtypeStruct((rows, dim), out_dtype),
            grid_spec=pltpu.PrefetchScalarGridSpec(
                num_scalar_prefetch=0,
                grid=grid,
                in_specs=[
                    pl.BlockSpec((block_rows, dim), lambda i: (i, 0)),
                    # weight: constant block index -> DMA'd once, stays resident.
                    pl.BlockSpec((1, dim), lambda i: (0, 0)),
                ],
                out_specs=pl.BlockSpec((block_rows, dim), lambda i: (i, 0)),
            ),
            compiler_params=pltpu.CompilerParams(
                dimension_semantics=dim_semantics,
                vmem_limit_bytes=vmem_limit),
        )(x2d, w2d)

    if num_cores > 1 and grid[0] > 1:
        # Real two-TC sharding on v7x; fall back if this chip/version rejects it.
        try:
            out = _call((pltpu.CORE_PARALLEL,))
        except Exception:
            out = _call(("parallel",))
    else:
        out = _call(("parallel",))

    return out.reshape(orig_shape[:-1] + (dim,))


def rmsnorm_ref(x, weight, eps=1e-5):
    xf = x.astype(jnp.float32)
    normed = xf * jax.lax.rsqrt(jnp.mean(xf * xf, axis=-1, keepdims=True) + eps)
    return normed.astype(x.dtype) * weight   # jnp promotion == torch promotion


if __name__ == "__main__":
    key = jax.random.PRNGKey(0)

    # Case 1: f32 activations, default weight init (ones) — module default.
    batch, seq, hidden = 2, 8, 128
    x = jax.random.normal(key, (batch, seq, hidden), dtype=jnp.float32)
    weight = jnp.ones((hidden,), dtype=jnp.float32)
    out = jax.block_until_ready(rmsnorm(x, weight, eps=1e-5))
    ref = rmsnorm_ref(x, weight, eps=1e-5)
    assert out.shape == x.shape and out.dtype == x.dtype
    assert jnp.allclose(out, ref, atol=1e-5, rtol=1e-5), "f32 mismatch vs reference"

    # Case 2: ragged row count (partial last block path, no wrapper padding).
    k2, k3 = jax.random.split(key)
    x2 = jax.random.normal(k2, (3, 5, 128), dtype=jnp.float32)
    w2 = jax.random.normal(k3, (128,), dtype=jnp.float32) * 0.1 + 1.0
    out2 = jax.block_until_ready(rmsnorm(x2, w2, eps=1e-5))
    ref2 = rmsnorm_ref(x2, w2, eps=1e-5)
    assert jnp.allclose(out2, ref2, atol=1e-5, rtol=1e-5), "ragged f32 mismatch"

    # Case 3: bf16 activations + f32 weight -> output promotes to f32 (matches
    # torch's `output.type_as(x) * self.weight` with an f32 parameter).
    x3 = jax.random.normal(k3, (2, 20, 128), dtype=jnp.bfloat16)
    out3 = jax.block_until_ready(rmsnorm(x3, weight, eps=1e-5))
    ref3 = rmsnorm_ref(x3, weight, eps=1e-5)
    assert out3.dtype == jnp.float32, "mixed-dtype promotion mismatch"
    assert jnp.allclose(out3, ref3, atol=2e-2, rtol=2e-2), "bf16/f32 mismatch"

    # Case 4: all-bf16 path (16-row sublane packing, f32 accumulation inside).
    x4 = jax.random.normal(k2, (4, 16, 128), dtype=jnp.bfloat16)
    w4 = (jax.random.normal(key, (128,), dtype=jnp.float32) * 0.1 + 1.0).astype(jnp.bfloat16)
    out4 = jax.block_until_ready(rmsnorm(x4, w4, eps=1e-5))
    ref4 = rmsnorm_ref(x4, w4, eps=1e-5)
    assert out4.dtype == jnp.bfloat16
    assert jnp.allclose(out4.astype(jnp.float32), ref4.astype(jnp.float32),
                        atol=2e-2, rtol=2e-2), "bf16 mismatch vs reference"

    print("KERNEL_OK")
</pallas_src>

<mosaic_0001>
module attributes {stable_mosaic.version = 11 : i64} {
  func.func @_rmsnorm_kernel(%arg0: i32, %arg1: memref<16x128xf32, #tpu.memory_space<vmem>>, %arg2: memref<1x128xf32, #tpu.memory_space<vmem>>, %arg3: memref<16x128xf32, #tpu.memory_space<vmem>>) attributes {dimension_semantics = [#tpu.dimension_semantics<parallel>], iteration_bounds = array<i64: 1>, scalar_prefetch = 0 : i64, scratch_operands = 0 : i64, tpu.core_type = #tpu.core_type<tc>, window_params = [{transform_indices = @transform_0, window_bounds = array<i64: 16, 128>}, {pipeline_mode = #tpu.pipeline_mode<synchronous>, transform_indices = @transform_1, window_bounds = array<i64: 1, 128>}, {transform_indices = @transform_2, window_bounds = array<i64: 16, 128>}]} {
    %c0 = arith.constant 0 : index
    %c0_0 = arith.constant 0 : index
    %0 = vector.load %arg1[%c0, %c0_0] : memref<16x128xf32, #tpu.memory_space<vmem>>, vector<16x128xf32>
    %1 = arith.mulf %0, %0 : vector<16x128xf32>
    %cst = arith.constant dense<0.000000e+00> : vector<16xf32>
    %2 = vector.multi_reduction <add>, %1, %cst [1] : vector<16x128xf32> to vector<16xf32>
    %3 = vector.shape_cast %2 : vector<16xf32> to vector<16x1xf32>
    %cst_1 = arith.constant 1.280000e+02 : f32
    %4 = vector.broadcast %cst_1 : f32 to vector<16x1xf32>
    %5 = arith.divf %3, %4 : vector<16x1xf32>
    %cst_2 = arith.constant 9.99999974E-6 : f32
    %6 = vector.broadcast %cst_2 : f32 to vector<16x1xf32>
    %7 = arith.addf %5, %6 : vector<16x1xf32>
    %8 = math.rsqrt %7 : vector<16x1xf32>
    %9 = vector.broadcast %8 : vector<16x1xf32> to vector<16x128xf32>
    %10 = arith.mulf %0, %9 : vector<16x128xf32>
    %c0_3 = arith.constant 0 : index
    %c0_4 = arith.constant 0 : index
    %11 = vector.load %arg2[%c0_3, %c0_4] : memref<1x128xf32, #tpu.memory_space<vmem>>, vector<1x128xf32>
    %12 = vector.broadcast %11 : vector<1x128xf32> to vector<16x128xf32>
    %13 = arith.mulf %10, %12 : vector<16x128xf32>
    %c0_5 = arith.constant 0 : index
    %c0_6 = arith.constant 0 : index
    %14 = vector.load %arg3[%c0_5, %c0_6] : memref<16x128xf32, #tpu.memory_space<vmem>>, vector<16x128xf32>
    tpu.vector_store %arg3[%c0_5, %c0_6], %13 {strides = array<i32>} : memref<16x128xf32, #tpu.memory_space<vmem>>, vector<16x128xf32>,
    return
  }
  func.func @transform_0(%arg0: i32) -> (i32, i32) {
    %c0_i32 = arith.constant 0 : i32
    %c0_i32_0 = arith.constant 0 : i32
    return %arg0, %c0_i32 : i32, i32
  }
  func.func @transform_1(%arg0: i32) -> (i32, i32) {
    %c0_i32 = arith.constant 0 : i32
    %c0_i32_0 = arith.constant 0 : i32
    %c0_i32_1 = arith.constant 0 : i32
    return %c0_i32, %c0_i32_0 : i32, i32
  }
  func.func @transform_2(%arg0: i32) -> (i32, i32) {
    %c0_i32 = arith.constant 0 : i32
    %c0_i32_0 = arith.constant 0 : i32
    return %arg0, %c0_i32 : i32, i32
  }
}

</mosaic_0001>

<llo_original>
// kernel: tpu_custom_call.1
$region0: #{tpu_custom_call.1}
  #allocation0 [shape = 'u32[]', space=smem, size = 0x4, offset = 0x4, fixed_abs, tag = 'smem constant byte address 0x4 - core index']
  #allocation1 [shape = 'u32[144,128]{1,0:T(1,128)}', space=vmem, size = 0x12000, scoped, tag = 'internal scratch']
  %s0 = inlined_call_operand.hbm [shape: f32[16,128], index: 0, kind: input, shape index: {}]
  %s1 = inlined_call_operand.hbm [shape: f32[1,128], index: 1, kind: input, shape index: {}]
  %s2 = inlined_call_operand.hbm [shape: f32[16,128], index: 2, kind: output, shape index: {}]
  %s3 = sld [smem:[#allocation0]]
  $region26: #{tpu_custom_call.1} parent=0
    _
  %s5 = ssub.s32 1, %s3
  %s6 = scalar_select 0, %s5, %s3
  $region1: #{tpu_custom_call.1} parent=0
    #allocation2 [shape = 'u8[8192]{0}', space=vmem, size = 0x2000, scoped, tag = 'input window, operand 0, single buffered']
    #allocation3 [shape = 's32[1]{0}', space=sflag, size = 0x4, scoped, tag = 'scoped memory for tpu_custom_call.1']
    #allocation4 [shape = 's32[1]{0}', space=sflag, size = 0x4, scoped, tag = 'scoped memory for tpu_custom_call.1']
    #allocation5 [shape = 'u8[512]{0}', space=vmem, size = 0x400, scoped, tag = 'input window, operand 1, single buffered']
    #allocation6 [shape = 's32[1]{0}', space=sflag, size = 0x4, scoped, tag = 'scoped memory for tpu_custom_call.1']
    #allocation7 [shape = 'u8[8192]{0}', space=vmem, size = 0x2000, scoped, tag = 'output window, operand 0, single buffered']
    %7 = vsyncpa [#allocation3], 0
    %8 = vsyncpa [#allocation6], 0
    %9 = vsyncpa [#allocation4], 0
    // Predicated region
    $region2: #{tpu_custom_call.1} parent=1 // pred_check
      _
    $region3: #{tpu_custom_call.1} parent=1 // pred_check_branch
      %11 = sbr.rel (0) target = $region5
    $region4: #{tpu_custom_call.1} parent=1 // pred_region
      %s13 = ssub.s32 256, 256
      %14 = vsyncadd [#allocation3], %s13
      %s15 = sshll.u32 [#allocation2], 4
      %s16 = int_to_ptr.vmem [resolvable:$true] %s15
      %21 = dma.hbm_to_vmem [thread:$0]  %s0, 256, %s16, [#allocation3], 128, 128, 8
    $region5: #{tpu_custom_call.1} parent=1 // pred_fallthru
      _
    // Predicated region
    $region6: #{tpu_custom_call.1} parent=1 // pred_check
      _
    $region7: #{tpu_custom_call.1} parent=1 // pred_check_branch
      %23 = sbr.rel (0) target = $region9
    $region8: #{tpu_custom_call.1} parent=1 // pred_region
      %s25 = ssub.s32 16, 16
      %26 = vsyncadd [#allocation6], %s25
      %s28 = sshll.u32 [#allocation5], 4
      %s29 = int_to_ptr.vmem [resolvable:$true] %s28
      %31 = dma.hbm_to_vmem [thread:$0]  %s1, 16, %s29, [#allocation6]
    $region9: #{tpu_custom_call.1} parent=1 // pred_fallthru
      _
    // Predicated region
    $region10: #{tpu_custom_call.1} parent=1 // pred_check
      _
    $region11: #{tpu_custom_call.1} parent=1 // pred_check_branch
      %33 = sbr.rel (0) target = $region13
    $region12: #{tpu_custom_call.1} parent=1 // pred_region
      %34 = dma.done [#allocation3], 256
    $region13: #{tpu_custom_call.1} parent=1 // pred_fallthru
      _
    // Predicated region
    $region14: #{tpu_custom_call.1} parent=1 // pred_check
      _
    $region15: #{tpu_custom_call.1} parent=1 // pred_check_branch
      %36 = sbr.rel (0) target = $region17
    $region16: #{tpu_custom_call.1} parent=1 // pred_region
      %37 = dma.done [#allocation6], 16
    $region17: #{tpu_custom_call.1} parent=1 // pred_fallthru
      _
    %v38 = vld [vmem:[#allocation2] sm:$0xff]
    %v39 = vld [vmem:[#allocation2 + $0x8] sm:$0xff]
    %v40 = vmul.f32 %v38, %v38
    %v41 = vmul.f32 %v39, %v39
    %42 = vadd.xlane.f32.xlu0 %v40
    %v43 = vpop.xlane.xlu0 %42
    %44 = vadd.xlane.f32.xlu0 %v41
    %v45 = vpop.xlane.xlu0 %44
    %v46 = vrcp.pop 128.0
    %v47 = vmul.f32 %v43, %v46
    %v48 = vmul.f32 %v45, %v46
    %v49 = vadd.f32 %v47, 1e-05
    %v50 = vadd.f32 %v48, 1e-05
    %v51 = vrsqrt.pop %v49
    %v52 = vrsqrt.pop %v50
    %v53 = vmul.f32 %v38, %v51
    %v54 = vmul.f32 %v39, %v52
    %v55 = vld [vmem:[#allocation5] sm:$0x1]
    %v57 = vlaneseq
    %v58 = vshrl.u32 %v57, 7
    %v59 = vsub.s32 0, %v58
    %v60 = vrot.slane %v55, %v59
    %v62 = vmul.f32 %v53, %v60
    %v63 = vmul.f32 %v54, %v60
    %64 = vst [vmem:[#allocation7] sm:$0xff] %v62
    %65 = vst [vmem:[#allocation7 + $0x8] sm:$0xff] %v63
    // Predicated region
    $region18: #{tpu_custom_call.1} parent=1 // pred_check
      _
    $region19: #{tpu_custom_call.1} parent=1 // pred_check_branch
      %67 = sbr.rel (0) target = $region21
    $region20: #{tpu_custom_call.1} parent=1 // pred_region
      %s69 = ssub.s32 256, 256
      %70 = vsyncadd [#allocation4], %s69
      %s71 = sshll.u32 [#allocation7], 4
      %s72 = int_to_ptr.vmem [resolvable:$true] %s71
      %77 = dma.vmem_to_hbm [thread:$0]  %s72, 256, %s2, [#allocation4], 128, 128, 8
    $region21: #{tpu_custom_call.1} parent=1 // pred_fallthru
      _
    // Predicated region
    $region22: #{tpu_custom_call.1} parent=1 // pred_check
      _
    $region23: #{tpu_custom_call.1} parent=1 // pred_check_branch
      %79 = sbr.rel (0) target = $region25
    $region24: #{tpu_custom_call.1} parent=1 // pred_region
      %80 = dma.done [#allocation4], 256
    $region25: #{tpu_custom_call.1} parent=1 // pred_fallthru
      _
    %81 = vsyncpa [#allocation3], 1
    %82 = vsyncpa [#allocation6], 1
    %83 = vsyncpa [#allocation4], 1

</llo_original>
